<compile_context>
chip_gen: v5e
topology: v5e:2x2
jax: 0.10.0
libtpu: 0.0.40
codegen_flags: <defaults>
</compile_context>

<pallas_src>
import jax
import jax.numpy as jnp
from jax.experimental import pallas as pl
from jax.experimental.pallas import tpu as pltpu

_LANE = 128
_ROW = 16          # batch-row granularity (sublane multiple; covers bf16 packing)
_TB_CAP = 1024     # max rows per grid step (amortizes ~0.35us/step overhead)


def _round_up(n: int, m: int) -> int:
    return ((n + m - 1) // m) * m


def _cdiv(a: int, b: int) -> int:
    return (a + b - 1) // b


def _make_mlp_kernel(num_layers: int, d_in: int, out_dim: int):
    """Fused MLP kernel.

    Ref order: x, (w0, b0, w1, b1, ...), out, xpad_scratch.
    """

    def kernel(*refs):
        x_ref = refs[0]
        out_ref = refs[-2]
        xpad = refs[-1]                              # VMEM (TB, D_in_p) bf16
        p = refs[1:-2]

        # Build the lane-padded bf16 first-layer operand: zero the scratch and
        # write the real d_in lanes (masked sub-lane store).  Zeroing every
        # step keeps this correct under megacore grid splitting.
        xpad[...] = jnp.zeros_like(xpad)
        xpad[:, :d_in] = x_ref[...]

        # Layer 0: bf16 MXU matmul, fp32 accumulate, fp32 bias.
        h = jnp.dot(xpad[...], p[0][...],
                    preferred_element_type=jnp.float32) + p[1][...]

        # Hidden activations + remaining layers.
        for i in range(1, num_layers):
            h = jnp.tanh(h)                          # fp32 (safe on v5e)
            h = jnp.dot(h.astype(jnp.bfloat16), p[2 * i][...],
                        preferred_element_type=jnp.float32) + p[2 * i + 1][...]

        # Numerically stable softmax over the full 128 lanes.  Padded lanes of
        # the final layer carry a -1e30 bias (folded mask), so exp() underflows
        # to exactly 0 there and they do not contribute to the normalization.
        m = jnp.max(h, axis=-1, keepdims=True)
        e = jnp.exp(h - m)
        s = jnp.sum(e, axis=-1, keepdims=True)
        probs = e * pl.reciprocal(s, approx=False)   # exact normalization

        # Narrow store: only the real action lanes go back to HBM.
        out_ref[...] = probs[:, :out_dim]

    return kernel


def init_params(layer_dims, key):
    """nn.Linear-style init: uniform(-1/sqrt(fan_in)).  W: [in, out], b: [1, out]."""
    params = []
    for i in range(1, len(layer_dims)):
        in_dim, out_dim = layer_dims[i - 1], layer_dims[i]
        key, kw, kb = jax.random.split(key, 3)
        bound = 1.0 / (in_dim ** 0.5)
        w = jax.random.uniform(kw, (in_dim, out_dim), jnp.float32, -bound, bound)
        b = jax.random.uniform(kb, (1, out_dim), jnp.float32, -bound, bound)
        params.append((w, b))
    return params


def pad_params(params):
    """Zero-pad weights/biases to lane-aligned shapes once at init.

    Weights in bf16 (MXU-native), biases in fp32.  The padded lanes of the
    FINAL layer's bias are set to -1e30: padded weight columns already yield 0,
    so the bias alone carries the softmax lane mask (no iota/where in-kernel).
    """
    padded = []
    n = len(params)
    for li, (w, b) in enumerate(params):
        in_p = _round_up(w.shape[0], _LANE)
        out_p = _round_up(w.shape[1], _LANE)
        wp = jnp.zeros((in_p, out_p), jnp.bfloat16)
        wp = wp.at[: w.shape[0], : w.shape[1]].set(w.astype(jnp.bfloat16))
        fill = -1e30 if li == n - 1 else 0.0
        bp = jnp.full((1, out_p), fill, jnp.float32)
        bp = bp.at[:, : b.shape[1]].set(b.astype(jnp.float32))
        padded.append((wp, bp))
    return padded


def reinforce_forward(x, padded_params, out_dim):
    """Forward pass: x [B, D_in] -> action probabilities [B, out_dim] (fp32)."""
    num_layers = len(padded_params)
    B, D_in = x.shape
    D_in_p = padded_params[0][0].shape[0]
    D_out_p = padded_params[-1][0].shape[1]
    assert D_in <= D_in_p and out_dim <= D_out_p

    # Minimal-padding batch tiling: rows rounded to 16, tile capped at _TB_CAP,
    # and >=2 grid steps for large B so both v7x TensorCores get work.
    B_r = _round_up(B, _ROW)
    n_steps = _cdiv(B_r, _TB_CAP)
    if B_r >= 512:
        n_steps = max(n_steps, 2)
    TB = _round_up(_cdiv(B_r, n_steps), _ROW)
    B_p = TB * n_steps

    # bf16 input stream, unpadded in the feature dim; pad rows only if needed.
    xb = x.astype(jnp.bfloat16)
    if B_p != B:
        xp = jnp.zeros((B_p, D_in), jnp.bfloat16).at[:B].set(xb)
    else:
        xp = xb

    flat = []
    in_specs = [pl.BlockSpec((TB, D_in), lambda i: (i, 0))]
    for w, b in padded_params:
        flat.extend([w, b])
        # Constant index_map -> weights/biases stay VMEM-resident across steps.
        in_specs.append(pl.BlockSpec(w.shape, lambda i: (0, 0)))
        in_specs.append(pl.BlockSpec(b.shape, lambda i: (0, 0)))

    kernel = _make_mlp_kernel(num_layers, D_in, out_dim)

    out = pl.pallas_call(
        kernel,
        out_shape=jax.ShapeDtypeStruct((B_p, out_dim), jnp.float32),
        grid=(n_steps,),
        in_specs=in_specs,
        out_specs=pl.BlockSpec((TB, out_dim), lambda i: (i, 0)),
        scratch_shapes=[pltpu.VMEM((TB, D_in_p), jnp.bfloat16)],
        compiler_params=pltpu.CompilerParams(
            dimension_semantics=("parallel",),     # megacore split on v7x
            vmem_limit_bytes=32 * 1024 * 1024,
        ),
    )(xp, *flat)

    return out[:B] if B_p != B else out


def reference_forward(x, params):
    """Pure-JAX reference with the SAME bf16-matmul / fp32-accumulate math."""
    h = x.astype(jnp.float32)
    for i, (w, b) in enumerate(params):
        h = jnp.dot(h.astype(jnp.bfloat16), w.astype(jnp.bfloat16),
                    preferred_element_type=jnp.float32) + b
        if i < len(params) - 1:
            h = jnp.tanh(h)
    return jax.nn.softmax(h, axis=-1)


if __name__ == "__main__":
    # Small shapes consistent with the module: layer_dims = (obs, hidden, hidden, actions)
    layer_dims = (8, 32, 32, 4)

    key = jax.random.PRNGKey(0)
    key, kx = jax.random.split(key)
    params = init_params(layer_dims, key)
    padded_params = pad_params(params)   # padded once at init

    # --- tiny batch (B=2): single grid step ---
    x_small = jax.random.normal(kx, (2, layer_dims[0]), dtype=jnp.float32)
    probs_small = jax.block_until_ready(
        reinforce_forward(x_small, padded_params, layer_dims[-1]))
    ref_small = reference_forward(x_small, params)
    assert probs_small.shape == (2, layer_dims[-1])
    assert jnp.allclose(probs_small, ref_small, atol=2e-3, rtol=2e-3)
    assert jnp.allclose(jnp.sum(probs_small, axis=-1), 1.0, atol=1e-2)

    # --- larger batch (B=600): exercises row padding + 2-step parallel grid ---
    key, kx2 = jax.random.split(key)
    x_big = jax.random.normal(kx2, (600, layer_dims[0]), dtype=jnp.float32)
    probs_big = jax.block_until_ready(
        reinforce_forward(x_big, padded_params, layer_dims[-1]))
    ref_big = reference_forward(x_big, params)
    assert probs_big.shape == (600, layer_dims[-1])
    assert jnp.allclose(probs_big, ref_big, atol=2e-3, rtol=2e-3)
    assert jnp.allclose(jnp.sum(probs_big, axis=-1), 1.0, atol=1e-2)

    print("KERNEL_OK")
</pallas_src>

<mosaic_0001>
module attributes {stable_mosaic.version = 11 : i64} {
  func.func @kernel(%arg0: i32, %arg1: memref<16x8xbf16, #tpu.memory_space<vmem>>, %arg2: memref<128x128xbf16, #tpu.memory_space<vmem>>, %arg3: memref<1x128xf32, #tpu.memory_space<vmem>>, %arg4: memref<128x128xbf16, #tpu.memory_space<vmem>>, %arg5: memref<1x128xf32, #tpu.memory_space<vmem>>, %arg6: memref<128x128xbf16, #tpu.memory_space<vmem>>, %arg7: memref<1x128xf32, #tpu.memory_space<vmem>>, %arg8: memref<16x4xf32, #tpu.memory_space<vmem>>, %arg9: memref<16x128xbf16, #tpu.memory_space<vmem>>) attributes {dimension_semantics = [#tpu.dimension_semantics<parallel>], iteration_bounds = array<i64: 1>, scalar_prefetch = 0 : i64, scratch_operands = 1 : i64, tpu.core_type = #tpu.core_type<tc>, window_params = [{transform_indices = @transform_0, window_bounds = array<i64: 16, 8>}, {pipeline_mode = #tpu.pipeline_mode<synchronous>, transform_indices = @transform_1, window_bounds = array<i64: 128, 128>}, {pipeline_mode = #tpu.pipeline_mode<synchronous>, transform_indices = @transform_2, window_bounds = array<i64: 1, 128>}, {pipeline_mode = #tpu.pipeline_mode<synchronous>, transform_indices = @transform_3, window_bounds = array<i64: 128, 128>}, {pipeline_mode = #tpu.pipeline_mode<synchronous>, transform_indices = @transform_4, window_bounds = array<i64: 1, 128>}, {pipeline_mode = #tpu.pipeline_mode<synchronous>, transform_indices = @transform_5, window_bounds = array<i64: 128, 128>}, {pipeline_mode = #tpu.pipeline_mode<synchronous>, transform_indices = @transform_6, window_bounds = array<i64: 1, 128>}, {transform_indices = @transform_7, window_bounds = array<i64: 16, 4>}]} {
    %cst = arith.constant 0.000000e+00 : bf16
    %0 = vector.broadcast %cst : bf16 to vector<16x128xbf16>
    %c0 = arith.constant 0 : index
    %c0_0 = arith.constant 0 : index
    %1 = vector.load %arg9[%c0, %c0_0] : memref<16x128xbf16, #tpu.memory_space<vmem>>, vector<16x128xbf16>
    tpu.vector_store %arg9[%c0, %c0_0], %0 {strides = array<i32>} : memref<16x128xbf16, #tpu.memory_space<vmem>>, vector<16x128xbf16>,
    %c0_1 = arith.constant 0 : index
    %c0_2 = arith.constant 0 : index
    %2 = vector.load %arg1[%c0_1, %c0_2] : memref<16x8xbf16, #tpu.memory_space<vmem>>, vector<16x8xbf16>
    %c0_3 = arith.constant 0 : index
    %c0_4 = arith.constant 0 : index
    %3 = vector.load %arg9[%c0_3, %c0_4] : memref<16x128xbf16, #tpu.memory_space<vmem>>, vector<16x8xbf16>
    tpu.vector_store %arg9[%c0_3, %c0_4], %2 {strides = array<i32>} : memref<16x128xbf16, #tpu.memory_space<vmem>>, vector<16x8xbf16>,
    %c0_5 = arith.constant 0 : index
    %c0_6 = arith.constant 0 : index
    %4 = vector.load %arg9[%c0_5, %c0_6] : memref<16x128xbf16, #tpu.memory_space<vmem>>, vector<16x128xbf16>
    %c0_7 = arith.constant 0 : index
    %c0_8 = arith.constant 0 : index
    %5 = vector.load %arg2[%c0_7, %c0_8] : memref<128x128xbf16, #tpu.memory_space<vmem>>, vector<128x128xbf16>
    %cst_9 = arith.constant dense<0.000000e+00> : vector<16x128xf32>
    %6 = tpu.matmul %4, %5, %cst_9 {dimension_numbers = #tpu.dot_dimension_numbers<[1], [0], [0], [1], [0, 0, 1, 1], [], []>} : vector<16x128xbf16>, vector<128x128xbf16>, vector<16x128xf32> -> vector<16x128xf32>
    %c0_10 = arith.constant 0 : index
    %c0_11 = arith.constant 0 : index
    %7 = vector.load %arg3[%c0_10, %c0_11] : memref<1x128xf32, #tpu.memory_space<vmem>>, vector<1x128xf32>
    %8 = vector.broadcast %7 : vector<1x128xf32> to vector<16x128xf32>
    %9 = arith.addf %6, %8 : vector<16x128xf32>
    %10 = math.tanh %9 : vector<16x128xf32>
    %11 = arith.truncf %10 : vector<16x128xf32> to vector<16x128xbf16>
    %c0_12 = arith.constant 0 : index
    %c0_13 = arith.constant 0 : index
    %12 = vector.load %arg4[%c0_12, %c0_13] : memref<128x128xbf16, #tpu.memory_space<vmem>>, vector<128x128xbf16>
    %cst_14 = arith.constant dense<0.000000e+00> : vector<16x128xf32>
    %13 = tpu.matmul %11, %12, %cst_14 {dimension_numbers = #tpu.dot_dimension_numbers<[1], [0], [0], [1], [0, 0, 1, 1], [], []>} : vector<16x128xbf16>, vector<128x128xbf16>, vector<16x128xf32> -> vector<16x128xf32>
    %c0_15 = arith.constant 0 : index
    %c0_16 = arith.constant 0 : index
    %14 = vector.load %arg5[%c0_15, %c0_16] : memref<1x128xf32, #tpu.memory_space<vmem>>, vector<1x128xf32>
    %15 = vector.broadcast %14 : vector<1x128xf32> to vector<16x128xf32>
    %16 = arith.addf %13, %15 : vector<16x128xf32>
    %17 = math.tanh %16 : vector<16x128xf32>
    %18 = arith.truncf %17 : vector<16x128xf32> to vector<16x128xbf16>
    %c0_17 = arith.constant 0 : index
    %c0_18 = arith.constant 0 : index
    %19 = vector.load %arg6[%c0_17, %c0_18] : memref<128x128xbf16, #tpu.memory_space<vmem>>, vector<128x128xbf16>
    %cst_19 = arith.constant dense<0.000000e+00> : vector<16x128xf32>
    %20 = tpu.matmul %18, %19, %cst_19 {dimension_numbers = #tpu.dot_dimension_numbers<[1], [0], [0], [1], [0, 0, 1, 1], [], []>} : vector<16x128xbf16>, vector<128x128xbf16>, vector<16x128xf32> -> vector<16x128xf32>
    %c0_20 = arith.constant 0 : index
    %c0_21 = arith.constant 0 : index
    %21 = vector.load %arg7[%c0_20, %c0_21] : memref<1x128xf32, #tpu.memory_space<vmem>>, vector<1x128xf32>
    %22 = vector.broadcast %21 : vector<1x128xf32> to vector<16x128xf32>
    %23 = arith.addf %20, %22 : vector<16x128xf32>
    %cst_22 = arith.constant dense<0xFF800000> : vector<16xf32>
    %24 = vector.multi_reduction <maximumf>, %23, %cst_22 [1] : vector<16x128xf32> to vector<16xf32>
    %25 = vector.shape_cast %24 : vector<16xf32> to vector<16x1xf32>
    %26 = vector.broadcast %25 : vector<16x1xf32> to vector<16x128xf32>
    %27 = arith.subf %23, %26 : vector<16x128xf32>
    %28 = math.exp %27 : vector<16x128xf32>
    %cst_23 = arith.constant dense<0.000000e+00> : vector<16xf32>
    %29 = vector.multi_reduction <add>, %28, %cst_23 [1] : vector<16x128xf32> to vector<16xf32>
    %30 = vector.shape_cast %29 : vector<16xf32> to vector<16x1xf32>
    %31 = tpu.reciprocal %30 : vector<16x1xf32> -> vector<16x1xf32>
    %32 = vector.broadcast %31 : vector<16x1xf32> to vector<16x128xf32>
    %33 = arith.mulf %28, %32 : vector<16x128xf32>
    %34 = vector.extract_strided_slice %33 {offsets = [0, 0], sizes = [16, 4], strides = [1, 1]} : vector<16x128xf32> to vector<16x4xf32>
    %c0_24 = arith.constant 0 : index
    %c0_25 = arith.constant 0 : index
    %35 = vector.load %arg8[%c0_24, %c0_25] : memref<16x4xf32, #tpu.memory_space<vmem>>, vector<16x4xf32>
    tpu.vector_store %arg8[%c0_24, %c0_25], %34 {strides = array<i32>} : memref<16x4xf32, #tpu.memory_space<vmem>>, vector<16x4xf32>,
    return
  }
  func.func @transform_0(%arg0: i32) -> (i32, i32) {
    %c0_i32 = arith.constant 0 : i32
    %c0_i32_0 = arith.constant 0 : i32
    return %arg0, %c0_i32 : i32, i32
  }
  func.func @transform_1(%arg0: i32) -> (i32, i32) {
    %c0_i32 = arith.constant 0 : i32
    %c0_i32_0 = arith.constant 0 : i32
    %c0_i32_1 = arith.constant 0 : i32
    return %c0_i32, %c0_i32_0 : i32, i32
  }
  func.func @transform_2(%arg0: i32) -> (i32, i32) {
    %c0_i32 = arith.constant 0 : i32
    %c0_i32_0 = arith.constant 0 : i32
    %c0_i32_1 = arith.constant 0 : i32
    return %c0_i32, %c0_i32_0 : i32, i32
  }
  func.func @transform_3(%arg0: i32) -> (i32, i32) {
    %c0_i32 = arith.constant 0 : i32
    %c0_i32_0 = arith.constant 0 : i32
    %c0_i32_1 = arith.constant 0 : i32
    return %c0_i32, %c0_i32_0 : i32, i32
  }
  func.func @transform_4(%arg0: i32) -> (i32, i32) {
    %c0_i32 = arith.constant 0 : i32
    %c0_i32_0 = arith.constant 0 : i32
    %c0_i32_1 = arith.constant 0 : i32
    return %c0_i32, %c0_i32_0 : i32, i32
  }
  func.func @transform_5(%arg0: i32) -> (i32, i32) {
    %c0_i32 = arith.constant 0 : i32
    %c0_i32_0 = arith.constant 0 : i32
    %c0_i32_1 = arith.constant 0 : i32
    return %c0_i32, %c0_i32_0 : i32, i32
  }
  func.func @transform_6(%arg0: i32) -> (i32, i32) {
    %c0_i32 = arith.constant 0 : i32
    %c0_i32_0 = arith.constant 0 : i32
    %c0_i32_1 = arith.constant 0 : i32
    return %c0_i32, %c0_i32_0 : i32, i32
  }
  func.func @transform_7(%arg0: i32) -> (i32, i32) {
    %c0_i32 = arith.constant 0 : i32
    %c0_i32_0 = arith.constant 0 : i32
    return %arg0, %c0_i32 : i32, i32
  }
}

</mosaic_0001>

<llo_original>
// kernel: tpu_custom_call.1
$region0: #{tpu_custom_call.1}
  #allocation0 [shape = 'u32[]', space=smem, size = 0x4, offset = 0x4, fixed_abs, tag = 'smem constant byte address 0x4 - core index']
  #allocation1 [shape = 'u32[72,128]{1,0:T(1,128)}', space=vmem, size = 0x9000, scoped, tag = 'internal scratch']
  #allocation2 [shape = 'bf16[16,128]{1,0:T(8,128)(2,1)}', space=vmem, size = 0x1000, scoped, tag = 'scratch operand']
  %s0 = inlined_call_operand.vmem [shape: bf16[16,8], index: 0, kind: input, shape index: {}]
  %s1 = inlined_call_operand.hbm [shape: bf16[128,128], index: 1, kind: input, shape index: {}]
  %s2 = inlined_call_operand.vmem [shape: f32[1,128], index: 2, kind: input, shape index: {}]
  %s3 = inlined_call_operand.hbm [shape: bf16[128,128], index: 3, kind: input, shape index: {}]
  %s4 = inlined_call_operand.vmem [shape: f32[1,128], index: 4, kind: input, shape index: {}]
  %s5 = inlined_call_operand.hbm [shape: bf16[128,128], index: 5, kind: input, shape index: {}]
  %s6 = inlined_call_operand.vmem [shape: f32[1,128], index: 6, kind: input, shape index: {}]
  %s7 = inlined_call_operand.vmem [shape: f32[16,4], index: 7, kind: output, shape index: {}]
  %s8 = sld [smem:[#allocation0]]
  $region50: #{tpu_custom_call.1} parent=0
    _
  %s10 = ssub.s32 1, %s8
  %s11 = scalar_select 0, %s10, %s8
  $region1: #{tpu_custom_call.1} parent=0
    #allocation3 [shape = 'u8[32768]{0}', space=vmem, size = 0x8000, scoped, tag = 'input window, operand 1, single buffered']
    #allocation4 [shape = 's32[1]{0}', space=sflag, size = 0x4, scoped, tag = 'scoped memory for tpu_custom_call.1']
    #allocation5 [shape = 'u8[32768]{0}', space=vmem, size = 0x8000, scoped, tag = 'input window, operand 3, single buffered']
    #allocation6 [shape = 's32[1]{0}', space=sflag, size = 0x4, scoped, tag = 'scoped memory for tpu_custom_call.1']
    #allocation7 [shape = 'u8[32768]{0}', space=vmem, size = 0x8000, scoped, tag = 'input window, operand 5, single buffered']
    %12 = vsyncpa [#allocation4], 0
    %13 = vsyncpa [#allocation6], 0
    // Predicated region
    $region2: #{tpu_custom_call.1} parent=1 // pred_check
      _
    $region3: #{tpu_custom_call.1} parent=1 // pred_check_branch
      %15 = sbr.rel (0) target = $region5
    $region4: #{tpu_custom_call.1} parent=1 // pred_region
      _
    $region5: #{tpu_custom_call.1} parent=1 // pred_fallthru
      _
    // Predicated region
    $region6: #{tpu_custom_call.1} parent=1 // pred_check
      _
    $region7: #{tpu_custom_call.1} parent=1 // pred_check_branch
      %17 = sbr.rel (0) target = $region9
    $region8: #{tpu_custom_call.1} parent=1 // pred_region
      %19 = vsyncadd [#allocation4], 0
      %s20 = sshll.u32 %s1, 4
      %s21 = int_to_ptr.hbm [resolvable:$true] %s20
      %s22 = sshll.u32 [#allocation3], 4
      %s23 = int_to_ptr.vmem [resolvable:$true] %s22
      %28 = dma.hbm_to_vmem [thread:$0]  %s21, 1024, %s23, [#allocation4], 64, 64, 4
    $region9: #{tpu_custom_call.1} parent=1 // pred_fallthru
      _
    // Predicated region
    $region10: #{tpu_custom_call.1} parent=1 // pred_check
      _
    $region11: #{tpu_custom_call.1} parent=1 // pred_check_branch
      %30 = sbr.rel (0) target = $region13
    $region12: #{tpu_custom_call.1} parent=1 // pred_region
      _
    $region13: #{tpu_custom_call.1} parent=1 // pred_fallthru
      _
    // Predicated region
    $region14: #{tpu_custom_call.1} parent=1 // pred_check
      _
    $region15: #{tpu_custom_call.1} parent=1 // pred_check_branch
      %32 = sbr.rel (0) target = $region17
    $region16: #{tpu_custom_call.1} parent=1 // pred_region
      %34 = vsyncadd [#allocation6], 0
      %s35 = sshll.u32 %s3, 4
      %s36 = int_to_ptr.hbm [resolvable:$true] %s35
      %s37 = sshll.u32 [#allocation5], 4
      %s38 = int_to_ptr.vmem [resolvable:$true] %s37
      %43 = dma.hbm_to_vmem [thread:$0]  %s36, 1024, %s38, [#allocation6], 64, 64, 4
    $region17: #{tpu_custom_call.1} parent=1 // pred_fallthru
      _
    // Predicated region
    $region18: #{tpu_custom_call.1} parent=1 // pred_check
      _
    $region19: #{tpu_custom_call.1} parent=1 // pred_check_branch
      %45 = sbr.rel (0) target = $region21
    $region20: #{tpu_custom_call.1} parent=1 // pred_region
      _
    $region21: #{tpu_custom_call.1} parent=1 // pred_fallthru
      _
    // Predicated region
    $region22: #{tpu_custom_call.1} parent=1 // pred_check
      _
    $region23: #{tpu_custom_call.1} parent=1 // pred_check_branch
      %47 = sbr.rel (0) target = $region25
    $region24: #{tpu_custom_call.1} parent=1 // pred_region
      %49 = vsyncadd [#allocation6], 0
      %s50 = sshll.u32 %s5, 4
      %s51 = int_to_ptr.hbm [resolvable:$true] %s50
      %s52 = sshll.u32 [#allocation7], 4
      %s53 = int_to_ptr.vmem [resolvable:$true] %s52
      %58 = dma.hbm_to_vmem [thread:$0]  %s51, 1024, %s53, [#allocation6], 64, 64, 4
    $region25: #{tpu_custom_call.1} parent=1 // pred_fallthru
      _
    // Predicated region
    $region26: #{tpu_custom_call.1} parent=1 // pred_check
      _
    $region27: #{tpu_custom_call.1} parent=1 // pred_check_branch
      %60 = sbr.rel (0) target = $region29
    $region28: #{tpu_custom_call.1} parent=1 // pred_region
      _
    $region29: #{tpu_custom_call.1} parent=1 // pred_fallthru
      _
    // Predicated region
    $region30: #{tpu_custom_call.1} parent=1 // pred_check
      _
    $region31: #{tpu_custom_call.1} parent=1 // pred_check_branch
      %62 = sbr.rel (0) target = $region33
    $region32: #{tpu_custom_call.1} parent=1 // pred_region
      %64 = dma.done [#allocation4], 1024
    $region33: #{tpu_custom_call.1} parent=1 // pred_fallthru
      _
    // Predicated region
    $region34: #{tpu_custom_call.1} parent=1 // pred_check
      _
    $region35: #{tpu_custom_call.1} parent=1 // pred_check_branch
      %66 = sbr.rel (0) target = $region37
    $region36: #{tpu_custom_call.1} parent=1 // pred_region
      %68 = dma.done [#allocation6], 1024
    $region37: #{tpu_custom_call.1} parent=1 // pred_fallthru
      _
    // Predicated region
    $region38: #{tpu_custom_call.1} parent=1 // pred_check
      _
    $region39: #{tpu_custom_call.1} parent=1 // pred_check_branch
      %70 = sbr.rel (0) target = $region41
    $region40: #{tpu_custom_call.1} parent=1 // pred_region
      %72 = dma.done [#allocation6], 1024
    $region41: #{tpu_custom_call.1} parent=1 // pred_fallthru
      _
    %74 = vst [vmem:[#allocation2] sm:$0xf] 0
    %75 = vst [vmem:[#allocation2 + $0x4] sm:$0xf] 0
    %v76 = vld [vmem:[%s0] sm:$0xf]
    %v77 = vld [vmem:[%s0 + $0x4] sm:$0xf]
    %vm78 = vcmask 60416
    %79 = vst.msk [vmem:[#allocation2] sm:$0xf] %vm78, %v76
    %80 = vst.msk [vmem:[#allocation2 + $0x4] sm:$0xf] %vm78, %v77
    %v81 = vld [vmem:[#allocation2] sm:$0xf]
    %v82 = vld [vmem:[#allocation2 + $0x4] sm:$0xf]
    %v83 = vld [vmem:[#allocation3] sm:$0xf]
    %v84 = vld [vmem:[#allocation3 + $0x4] sm:$0xf]
    %v85 = vld [vmem:[#allocation3 + $0x8] sm:$0xf]
    %v86 = vld [vmem:[#allocation3 + $0xc] sm:$0xf]
    %v87 = vld [vmem:[#allocation3 + $0x10] sm:$0xf]
    %v88 = vld [vmem:[#allocation3 + $0x14] sm:$0xf]
    %v89 = vld [vmem:[#allocation3 + $0x18] sm:$0xf]
    %v90 = vld [vmem:[#allocation3 + $0x1c] sm:$0xf]
    %v91 = vld [vmem:[#allocation3 + $0x20] sm:$0xf]
    %v92 = vld [vmem:[#allocation3 + $0x24] sm:$0xf]
    %v93 = vld [vmem:[#allocation3 + $0x28] sm:$0xf]
    %v94 = vld [vmem:[#allocation3 + $0x2c] sm:$0xf]
    %v95 = vld [vmem:[#allocation3 + $0x30] sm:$0xf]
    %v96 = vld [vmem:[#allocation3 + $0x34] sm:$0xf]
    %v97 = vld [vmem:[#allocation3 + $0x38] sm:$0xf]
    %v98 = vld [vmem:[#allocation3 + $0x3c] sm:$0xf]
    %v99 = vld [vmem:[%s2] sm:$0x1]
    %v101 = vperm.slane %v99, 0
    %v105 = vunpack.c.l.b16 %v81
    %v106 = vunpack.c.l.b16 %v82
    %v107 = vpack.c.b16 %v106, %v105
    %v125 = vunpack.c.l.b16 %v83
    %v126 = vunpack.c.l.b16 %v84
    %v127 = vunpack.c.l.b16 %v85
    %v128 = vunpack.c.l.b16 %v86
    %v129 = vunpack.c.l.b16 %v87
    %v130 = vunpack.c.l.b16 %v88
    %v131 = vunpack.c.l.b16 %v89
    %v132 = vunpack.c.l.b16 %v90
    %v133 = vunpack.c.l.b16 %v91
    %v134 = vunpack.c.l.b16 %v92
    %v135 = vunpack.c.l.b16 %v93
    %v136 = vunpack.c.l.b16 %v94
    %v137 = vunpack.c.l.b16 %v95
    %v138 = vunpack.c.l.b16 %v96
    %v139 = vunpack.c.l.b16 %v97
    %v140 = vunpack.c.l.b16 %v98
    %v141 = vpack.c.b16 %v126, %v125
    %v142 = vpack.c.b16 %v128, %v127
    %v143 = vpack.c.b16 %v130, %v129
    %v144 = vpack.c.b16 %v132, %v131
    %v145 = vpack.c.b16 %v134, %v133
    %v146 = vpack.c.b16 %v136, %v135
    %v147 = vpack.c.b16 %v138, %v137
    %v148 = vpack.c.b16 %v140, %v139
    %157 = vmatpush.bf16.msra.mxu0 %v148
    %158 = vmatpush.bf16.msra.mxu0 %v147
    %159 = vmatpush.bf16.msra.mxu0 %v146
    %160 = vmatpush.bf16.msra.mxu0 %v145
    %161 = vmatpush.bf16.msra.mxu0 %v144
    %162 = vmatpush.bf16.msra.mxu0 %v143
    %163 = vmatpush.bf16.msra.mxu0 %v142
    %164 = vmatpush.bf16.msra.mxu0 %v141
    %165 = vmatmul.bf16.gmra.mxu0 %v107
    %v166 = vpop.f32.mrf.mxu0
    %v167 = vadd.f32 %v101, %v166
    %v168 = vpop.f32.mrf.mxu0
    %v169 = vadd.f32 %v101, %v168
    %170 = vdwg.mxu0
    %v171 = vtanh.pop %v167
    %v172 = vtanh.pop %v169
    %v173 = vpack.c.bf16 %v172, %v171
    %v174 = vld [vmem:[#allocation5] sm:$0xf]
    %v175 = vld [vmem:[#allocation5 + $0x4] sm:$0xf]
    %v176 = vld [vmem:[#allocation5 + $0x8] sm:$0xf]
    %v177 = vld [vmem:[#allocation5 + $0xc] sm:$0xf]
    %v178 = vld [vmem:[#allocation5 + $0x10] sm:$0xf]
    %v179 = vld [vmem:[#allocation5 + $0x14] sm:$0xf]
    %v180 = vld [vmem:[#allocation5 + $0x18] sm:$0xf]
    %v181 = vld [vmem:[#allocation5 + $0x1c] sm:$0xf]
    %v182 = vld [vmem:[#allocation5 + $0x20] sm:$0xf]
    %v183 = vld [vmem:[#allocation5 + $0x24] sm:$0xf]
    %v184 = vld [vmem:[#allocation5 + $0x28] sm:$0xf]
    %v185 = vld [vmem:[#allocation5 + $0x2c] sm:$0xf]
    %v186 = vld [vmem:[#allocation5 + $0x30] sm:$0xf]
    %v187 = vld [vmem:[#allocation5 + $0x34] sm:$0xf]
    %v188 = vld [vmem:[#allocation5 + $0x38] sm:$0xf]
    %v189 = vld [vmem:[#allocation5 + $0x3c] sm:$0xf]
    %v190 = vld [vmem:[%s4] sm:$0x1]
    %v192 = vperm.slane %v190, 0
    %v210 = vunpack.c.l.b16 %v174
    %v211 = vunpack.c.l.b16 %v175
    %v212 = vunpack.c.l.b16 %v176
    %v213 = vunpack.c.l.b16 %v177
    %v214 = vunpack.c.l.b16 %v178
    %v215 = vunpack.c.l.b16 %v179
    %v216 = vunpack.c.l.b16 %v180
    %v217 = vunpack.c.l.b16 %v181
    %v218 = vunpack.c.l.b16 %v182
    %v219 = vunpack.c.l.b16 %v183
    %v220 = vunpack.c.l.b16 %v184
    %v221 = vunpack.c.l.b16 %v185
    %v222 = vunpack.c.l.b16 %v186
    %v223 = vunpack.c.l.b16 %v187
    %v224 = vunpack.c.l.b16 %v188
    %v225 = vunpack.c.l.b16 %v189
    %v226 = vpack.c.b16 %v211, %v210
    %v227 = vpack.c.b16 %v213, %v212
    %v228 = vpack.c.b16 %v215, %v214
    %v229 = vpack.c.b16 %v217, %v216
    %v230 = vpack.c.b16 %v219, %v218
    %v231 = vpack.c.b16 %v221, %v220
    %v232 = vpack.c.b16 %v223, %v222
    %v233 = vpack.c.b16 %v225, %v224
    %242 = vmatpush.bf16.msra.mxu0 %v233
    %243 = vmatpush.bf16.msra.mxu0 %v232
    %244 = vmatpush.bf16.msra.mxu0 %v231
    %245 = vmatpush.bf16.msra.mxu0 %v230
    %246 = vmatpush.bf16.msra.mxu0 %v229
    %247 = vmatpush.bf16.msra.mxu0 %v228
    %248 = vmatpush.bf16.msra.mxu0 %v227
    %249 = vmatpush.bf16.msra.mxu0 %v226
    %250 = vmatmul.bf16.gmra.mxu0 %v173
    %v251 = vpop.f32.mrf.mxu0
    %v252 = vadd.f32 %v192, %v251
    %v253 = vpop.f32.mrf.mxu0
    %v254 = vadd.f32 %v192, %v253
    %255 = vdwg.mxu0
    %v256 = vtanh.pop %v252
    %v257 = vtanh.pop %v254
    %v258 = vpack.c.bf16 %v257, %v256
    %v259 = vld [vmem:[#allocation7] sm:$0xf]
    %v260 = vld [vmem:[#allocation7 + $0x4] sm:$0xf]
    %v261 = vld [vmem:[#allocation7 + $0x8] sm:$0xf]
    %v262 = vld [vmem:[#allocation7 + $0xc] sm:$0xf]
    %v263 = vld [vmem:[#allocation7 + $0x10] sm:$0xf]
    %v264 = vld [vmem:[#allocation7 + $0x14] sm:$0xf]
    %v265 = vld [vmem:[#allocation7 + $0x18] sm:$0xf]
    %v266 = vld [vmem:[#allocation7 + $0x1c] sm:$0xf]
    %v267 = vld [vmem:[#allocation7 + $0x20] sm:$0xf]
    %v268 = vld [vmem:[#allocation7 + $0x24] sm:$0xf]
    %v269 = vld [vmem:[#allocation7 + $0x28] sm:$0xf]
    %v270 = vld [vmem:[#allocation7 + $0x2c] sm:$0xf]
    %v271 = vld [vmem:[#allocation7 + $0x30] sm:$0xf]
    %v272 = vld [vmem:[#allocation7 + $0x34] sm:$0xf]
    %v273 = vld [vmem:[#allocation7 + $0x38] sm:$0xf]
    %v274 = vld [vmem:[#allocation7 + $0x3c] sm:$0xf]
    %v275 = vld [vmem:[%s6] sm:$0x1]
    %v277 = vperm.slane %v275, 0
    %v295 = vunpack.c.l.b16 %v259
    %v296 = vunpack.c.l.b16 %v260
    %v297 = vunpack.c.l.b16 %v261
    %v298 = vunpack.c.l.b16 %v262
    %v299 = vunpack.c.l.b16 %v263
    %v300 = vunpack.c.l.b16 %v264
    %v301 = vunpack.c.l.b16 %v265
    %v302 = vunpack.c.l.b16 %v266
    %v303 = vunpack.c.l.b16 %v267
    %v304 = vunpack.c.l.b16 %v268
    %v305 = vunpack.c.l.b16 %v269
    %v306 = vunpack.c.l.b16 %v270
    %v307 = vunpack.c.l.b16 %v271
    %v308 = vunpack.c.l.b16 %v272
    %v309 = vunpack.c.l.b16 %v273
    %v310 = vunpack.c.l.b16 %v274
    %v311 = vpack.c.b16 %v296, %v295
    %v312 = vpack.c.b16 %v298, %v297
    %v313 = vpack.c.b16 %v300, %v299
    %v314 = vpack.c.b16 %v302, %v301
    %v315 = vpack.c.b16 %v304, %v303
    %v316 = vpack.c.b16 %v306, %v305
    %v317 = vpack.c.b16 %v308, %v307
    %v318 = vpack.c.b16 %v310, %v309
    %327 = vmatpush.bf16.msra.mxu0 %v318
    %328 = vmatpush.bf16.msra.mxu0 %v317
    %329 = vmatpush.bf16.msra.mxu0 %v316
    %330 = vmatpush.bf16.msra.mxu0 %v315
    %331 = vmatpush.bf16.msra.mxu0 %v314
    %332 = vmatpush.bf16.msra.mxu0 %v313
    %333 = vmatpush.bf16.msra.mxu0 %v312
    %334 = vmatpush.bf16.msra.mxu0 %v311
    %335 = vmatmul.bf16.gmra.mxu0 %v258
    %v336 = vpop.f32.mrf.mxu0
    %v337 = vadd.f32 %v277, %v336
    %v338 = vpop.f32.mrf.mxu0
    %v339 = vadd.f32 %v277, %v338
    %340 = vdwg.mxu0
    %341 = vmax.xlane.f32.xlu0 %v337
    %v342 = vpop.xlane.xlu0 %341
    %343 = vmax.xlane.f32.xlu0 %v339
    %v344 = vpop.xlane.xlu0 %343
    %v345 = vsub.f32 %v337, %v342
    %v346 = vsub.f32 %v339, %v344
    %v347 = vmul.f32 %v345, 1.442695
    %v348 = vpow.pop %v347
    %v349 = vmul.f32 %v346, 1.442695
    %v350 = vpow.pop %v349
    %351 = vadd.xlane.f32.xlu0 %v348
    %v352 = vpop.xlane.xlu0 %351
    %353 = vadd.xlane.f32.xlu0 %v350
    %v354 = vpop.xlane.xlu0 %353
    %v355 = vrcp.pop %v352
    %v356 = vmul.f32 %v352, %v355
    %v357 = vsub.f32 1.0, %v356
    %v358 = vmul.f32 %v355, %v357
    %v359 = vadd.f32 %v355, %v358
    %vm360 = vweird.f32 %v352
    %vm361 = vweird.f32 %v355
    %vm362 = vmor %vm360, %vm361
    %v363 = vsel %vm362, %v355, %v359
    %v364 = vand.u32 2147483647, %v352
    %vm365 = vcmp.eq.f32.partialorder %v364, 8.507059e+37
    %v366 = vand.u32 %v352, 2147483648
    %v367 = vor.u32 1.1754944e-38, %v366
    %v368 = vsel %vm365, %v367, %v363
    %v369 = vrcp.pop %v354
    %v370 = vmul.f32 %v354, %v369
    %v371 = vsub.f32 1.0, %v370
    %v372 = vmul.f32 %v369, %v371
    %v373 = vadd.f32 %v369, %v372
    %vm374 = vweird.f32 %v354
    %vm375 = vweird.f32 %v369
    %vm376 = vmor %vm374, %vm375
    %v377 = vsel %vm376, %v369, %v373
    %v378 = vand.u32 2147483647, %v354
    %vm379 = vcmp.eq.f32.partialorder %v378, 8.507059e+37
    %v380 = vand.u32 %v354, 2147483648
    %v381 = vor.u32 1.1754944e-38, %v380
    %v382 = vsel %vm379, %v381, %v377
    %v383 = vmul.f32 %v348, %v368
    %v384 = vmul.f32 %v350, %v382
    %vm385 = vcmask 31744
    %386 = vst.msk [vmem:[%s7] sm:$0xff] %vm385, %v383
    %387 = vst.msk [vmem:[%s7 + $0x8] sm:$0xff] %vm385, %v384
    // Predicated region
    $region42: #{tpu_custom_call.1} parent=1 // pred_check
      _
    $region43: #{tpu_custom_call.1} parent=1 // pred_check_branch
      %389 = sbr.rel (0) target = $region45
    $region44: #{tpu_custom_call.1} parent=1 // pred_region
      _
    $region45: #{tpu_custom_call.1} parent=1 // pred_fallthru
      _
    // Predicated region
    $region46: #{tpu_custom_call.1} parent=1 // pred_check
      _
    $region47: #{tpu_custom_call.1} parent=1 // pred_check_branch
      %391 = sbr.rel (0) target = $region49
    $region48: #{tpu_custom_call.1} parent=1 // pred_region
      _
    $region49: #{tpu_custom_call.1} parent=1 // pred_fallthru
      _
    %392 = vsyncpa [#allocation4], 1
    %393 = vsyncpa [#allocation6], 1

</llo_original>
